<compile_context>
chip_gen: v7x
topology: tpu7x:2x2x1
jax: 0.10.0
libtpu: 0.0.40
codegen_flags: <defaults>
</compile_context>

<pallas_src>
import jax
import jax.numpy as jnp
from jax.experimental import pallas as pl
from jax.experimental.pallas import tpu as pltpu


# --------------------------------------------------------------------------
# Kernel 1: fused Q/K/V projection  (q-scaling pre-folded into wqkv / bqkv)
# --------------------------------------------------------------------------
def qkv_proj_kernel(hs_ref, wqkv_ref, bqkv_ref, qkv_ref):
    x = hs_ref[0].astype(wqkv_ref.dtype)                       # [tt, E] bf16
    y = jnp.dot(x, wqkv_ref[...],
                preferred_element_type=jnp.float32)            # f32 accumulate
    y = y + bqkv_ref[...]                                      # bias add in f32
    qkv_ref[0] = y.astype(qkv_ref.dtype)                       # store bf16


# --------------------------------------------------------------------------
# Kernel 2: flash attention (online softmax over kv tiles) + fused
#           head-merge / output projection.
# --------------------------------------------------------------------------
def flash_attn_out_kernel(q_ref, k_ref, v_ref, wo_ref, bo_ref, out_ref,
                          m_scr, l_scr, acc_scr):
    ki = pl.program_id(2)
    num_heads = q_ref.shape[1]
    tq = q_ref.shape[2]
    E = wo_ref.shape[2]

    @pl.when(ki == 0)
    def _():
        m_scr[...] = jnp.full(m_scr.shape, -jnp.inf, m_scr.dtype)
        l_scr[...] = jnp.zeros(l_scr.shape, l_scr.dtype)
        acc_scr[...] = jnp.zeros(acc_scr.shape, acc_scr.dtype)

    q = q_ref[0]                                               # [H, tq, hd] bf16
    k = k_ref[0]                                               # [H, tkv, hd] bf16
    v = v_ref[0]                                               # [H, tkv, hd] bf16

    # Both operands contract their last dim -> no explicit k transpose.
    # (v6e note: verify via pl.lower_as_mlir that no XLU transpose is inserted.)
    s = jnp.einsum('hqd,hkd->hqk', q, k,
                   preferred_element_type=jnp.float32)         # [H, tq, tkv] f32
    # TODO(synk): causal / attention_mask would be added to `s` here (before
    # the row max), with masked positions set to -inf.

    m_prev = m_scr[...]
    m_new = jnp.maximum(m_prev, jnp.max(s, axis=-1, keepdims=True))
    alpha = jnp.exp(m_prev - m_new)                            # 0 on first step
    p = jnp.exp(s - m_new)
    l_scr[...] = alpha * l_scr[...] + jnp.sum(p, axis=-1, keepdims=True)
    acc_scr[...] = alpha * acc_scr[...] + jnp.einsum(
        'hqk,hkd->hqd', p.astype(v.dtype), v,
        preferred_element_type=jnp.float32)                    # [H, tq, hd] f32
    m_scr[...] = m_new

    @pl.when(ki == pl.num_programs(2) - 1)
    def _():
        # Normalize (EUP reciprocal; ~1e-4 rel, negligible vs. bf16 operands).
        ctx = acc_scr[...] * pl.reciprocal(l_scr[...], approx=True)
        ctx = ctx.astype(wo_ref.dtype)                         # [H, tq, hd] bf16
        wo = wo_ref[...]                                       # [H, hd, E] bf16
        # Fused head merge + output projection: out = sum_h ctx_h @ wo_h + bo.
        out = jnp.zeros((tq, E), jnp.float32)
        for h in range(num_heads):                             # static unroll
            out = out + jnp.dot(ctx[h], wo[h],
                                preferred_element_type=jnp.float32)
        out_ref[0] = (out + bo_ref[...]).astype(out_ref.dtype)


# --------------------------------------------------------------------------
# Wrapper
# --------------------------------------------------------------------------
def trocr_attention(hidden_states, wqkv, bqkv, wo_heads, bo, num_heads,
                    *, tq=None, tkv=None, tproj=None,
                    vmem_limit_bytes=32 * 1024 * 1024):
    """wqkv: [E, 3E] (q-scaled, bf16), bqkv: [1, 3E] f32,
    wo_heads: [H, hd, E] bf16, bo: [1, E] f32."""
    B, T, E = hidden_states.shape
    hd = E // num_heads

    # Tile sizes: use the largest tile that divides T (demo T=8 -> full seq).
    # At production (T~600, E=1024) use tq/tkv in the 128..256 range and
    # re-derive against 64 MiB VMEM on v7x (raise vmem_limit_bytes there).
    tproj = tproj or min(T, 256)
    tq = tq or min(T, 256)
    tkv = tkv or min(T, 256)
    assert T % tproj == 0 and T % tq == 0 and T % tkv == 0, \
        "TODO(synk): pad/mask ragged sequence lengths"

    # ---- Pallas kernel 1: fused QKV projection --------------------------
    qkv = pl.pallas_call(
        qkv_proj_kernel,
        out_shape=jax.ShapeDtypeStruct((B, T, 3 * E), wqkv.dtype),
        grid=(B, T // tproj),
        in_specs=[
            pl.BlockSpec((1, tproj, E), lambda b, t: (b, t, 0)),   # hidden
            pl.BlockSpec((E, 3 * E), lambda b, t: (0, 0)),         # fused W
            pl.BlockSpec((1, 3 * E), lambda b, t: (0, 0)),         # fused b (f32)
        ],
        out_specs=pl.BlockSpec((1, tproj, 3 * E), lambda b, t: (b, t, 0)),
        compiler_params=pltpu.CompilerParams(
            dimension_semantics=("parallel", "parallel"),
            vmem_limit_bytes=vmem_limit_bytes),
    )(hidden_states, wqkv, bqkv)

    # Head split between the two kernels as a plain XLA layout op (hd is not a
    # multiple of 128 lanes, so doing this inside Mosaic is pure misaligned
    # copy traffic -- see perf review).
    q, k, v = jnp.split(qkv, 3, axis=-1)
    to_heads = lambda x: x.reshape(B, T, num_heads, hd).transpose(0, 2, 1, 3)
    qh, kh, vh = to_heads(q), to_heads(k), to_heads(v)         # [B, H, T, hd] bf16

    # ---- Pallas kernel 2: flash attention + fused out-proj --------------
    out = pl.pallas_call(
        flash_attn_out_kernel,
        out_shape=jax.ShapeDtypeStruct((B, T, E), hidden_states.dtype),
        grid=(B, T // tq, T // tkv),
        in_specs=[
            pl.BlockSpec((1, num_heads, tq, hd), lambda b, qi, ki: (b, 0, qi, 0)),
            pl.BlockSpec((1, num_heads, tkv, hd), lambda b, qi, ki: (b, 0, ki, 0)),
            pl.BlockSpec((1, num_heads, tkv, hd), lambda b, qi, ki: (b, 0, ki, 0)),
            pl.BlockSpec((num_heads, hd, E), lambda b, qi, ki: (0, 0, 0)),
            pl.BlockSpec((1, E), lambda b, qi, ki: (0, 0)),
        ],
        out_specs=pl.BlockSpec((1, tq, E), lambda b, qi, ki: (b, qi, 0)),
        scratch_shapes=[
            pltpu.VMEM((num_heads, tq, 1), jnp.float32),   # running max
            pltpu.VMEM((num_heads, tq, 1), jnp.float32),   # running denom
            pltpu.VMEM((num_heads, tq, hd), jnp.float32),  # running context
        ],
        compiler_params=pltpu.CompilerParams(
            dimension_semantics=("parallel", "parallel", "arbitrary"),
            vmem_limit_bytes=vmem_limit_bytes),
    )(qh, kh, vh, wo_heads, bo)
    return out


def pack_trocr_params(wq, bq, wk, bk, wv, bv, wo, bo, num_heads,
                      param_dtype=jnp.bfloat16):
    """Pack torch-layout ([out,in]) weights into kernel layouts.

    Folds the query scaling ((x@Wq.T+bq)*s == x@(s*Wq).T + s*bq), fuses Q/K/V
    into one [E,3E] weight, reshapes out_proj into per-head [H, hd, E] blocks
    (head merge fused into the projection), and casts weights to bf16 while
    keeping biases in f32 (bias adds stay f32 in-kernel).
    """
    E = wq.shape[0]
    hd = E // num_heads
    scaling = float(hd) ** -0.5
    wqkv = jnp.concatenate([wq.T * scaling, wk.T, wv.T], axis=1).astype(param_dtype)
    bqkv = jnp.concatenate([bq * scaling, bk, bv]).reshape(1, 3 * E).astype(jnp.float32)
    wo_heads = wo.T.reshape(num_heads, hd, E).astype(param_dtype)   # [H, hd, E]
    bo_row = bo.reshape(1, E).astype(jnp.float32)
    return wqkv, bqkv, wo_heads, bo_row


def reference_trocr_attention(hidden, wq, bq, wk, bk, wv, bv, wo, bo, num_heads):
    """Pure-JAX f32 mirror of the PyTorch forward (torch [out,in] weights)."""
    B, T, E = hidden.shape
    hd = E // num_heads
    scaling = float(hd) ** -0.5
    q = (hidden @ wq.T + bq) * scaling
    k = hidden @ wk.T + bk
    v = hidden @ wv.T + bv
    shape = lambda x: x.reshape(B, T, num_heads, hd).transpose(0, 2, 1, 3)
    qh, kh, vh = shape(q), shape(k), shape(v)
    attn = jnp.einsum('bhqd,bhkd->bhqk', qh, kh)
    attn = jax.nn.softmax(attn, axis=-1)
    ctx = jnp.einsum('bhqk,bhkd->bhqd', attn, vh)
    ctx = ctx.transpose(0, 2, 1, 3).reshape(B, T, E)
    return ctx @ wo.T + bo


if __name__ == "__main__":
    B, T, E, H = 2, 8, 32, 4
    key = jax.random.PRNGKey(0)
    ks = jax.random.split(key, 9)

    hidden = jax.random.normal(ks[0], (B, T, E), jnp.float32)

    def make_linear(kw, kb, din, dout):
        # torch layout: weight [out, in], bias [out]
        w = jax.random.normal(kw, (dout, din), jnp.float32) * 0.05
        b = jax.random.normal(kb, (dout,), jnp.float32) * 0.05
        return w, b

    wq, bq = make_linear(ks[1], ks[2], E, E)
    wk, bk = make_linear(ks[3], ks[4], E, E)
    wv, bv = make_linear(ks[5], ks[6], E, E)
    wo, bo = make_linear(ks[7], ks[8], E, E)

    wqkv, bqkv, wo_heads, bo_row = pack_trocr_params(
        wq, bq, wk, bk, wv, bv, wo, bo, H)

    out = trocr_attention(hidden, wqkv, bqkv, wo_heads, bo_row, H)
    out = jax.block_until_ready(out)

    ref = reference_trocr_attention(hidden, wq, bq, wk, bk, wv, bv, wo, bo, H)
    assert out.shape == (B, T, E)
    # Tolerance reflects bf16 weights / bf16 MXU operands (f32 accumulation)
    # and the approximate EUP reciprocal in the softmax normalization.
    assert jnp.allclose(out, ref, atol=2e-2, rtol=2e-2), "mismatch vs reference"

    # TODO(synk): cross-attention (key_value_states), past_key_value cache,
    # attention_mask / layer_head_mask, dropout, and output_attentions are not
    # exercised (inference self-attention path only).
    print("KERNEL_OK")
</pallas_src>

<mosaic_0001>
module attributes {stable_mosaic.version = 11 : i64} {
  func.func @qkv_proj_kernel(%arg0: i32, %arg1: i32, %arg2: memref<1x8x32xf32, #tpu.memory_space<vmem>>, %arg3: memref<32x96xbf16, #tpu.memory_space<vmem>>, %arg4: memref<1x96xf32, #tpu.memory_space<vmem>>, %arg5: memref<1x8x96xbf16, #tpu.memory_space<vmem>>) attributes {dimension_semantics = [#tpu.dimension_semantics<parallel>, #tpu.dimension_semantics<parallel>], iteration_bounds = array<i64: 2, 1>, scalar_prefetch = 0 : i64, scratch_operands = 0 : i64, tpu.core_type = #tpu.core_type<tc>, window_params = [{transform_indices = @transform_0, window_bounds = array<i64: 1, 8, 32>}, {pipeline_mode = #tpu.pipeline_mode<synchronous>, transform_indices = @transform_1, window_bounds = array<i64: 32, 96>}, {pipeline_mode = #tpu.pipeline_mode<synchronous>, transform_indices = @transform_2, window_bounds = array<i64: 1, 96>}, {transform_indices = @transform_3, window_bounds = array<i64: 1, 8, 96>}]} {
    %c0 = arith.constant 0 : index
    %c0_0 = arith.constant 0 : index
    %c0_1 = arith.constant 0 : index
    %0 = vector.load %arg2[%c0, %c0_0, %c0_1] : memref<1x8x32xf32, #tpu.memory_space<vmem>>, vector<1x8x32xf32>
    %1 = vector.shape_cast %0 : vector<1x8x32xf32> to vector<8x32xf32>
    %2 = arith.truncf %1 : vector<8x32xf32> to vector<8x32xbf16>
    %c0_2 = arith.constant 0 : index
    %c0_3 = arith.constant 0 : index
    %3 = vector.load %arg3[%c0_2, %c0_3] : memref<32x96xbf16, #tpu.memory_space<vmem>>, vector<32x96xbf16>
    %cst = arith.constant dense<0.000000e+00> : vector<8x96xf32>
    %4 = tpu.matmul %2, %3, %cst {dimension_numbers = #tpu.dot_dimension_numbers<[1], [0], [0], [1], [0, 0, 1, 1], [], []>} : vector<8x32xbf16>, vector<32x96xbf16>, vector<8x96xf32> -> vector<8x96xf32>
    %c0_4 = arith.constant 0 : index
    %c0_5 = arith.constant 0 : index
    %5 = vector.load %arg4[%c0_4, %c0_5] : memref<1x96xf32, #tpu.memory_space<vmem>>, vector<1x96xf32>
    %6 = vector.broadcast %5 : vector<1x96xf32> to vector<8x96xf32>
    %7 = arith.addf %4, %6 : vector<8x96xf32>
    %8 = arith.truncf %7 : vector<8x96xf32> to vector<8x96xbf16>
    %c0_6 = arith.constant 0 : index
    %c0_7 = arith.constant 0 : index
    %c0_8 = arith.constant 0 : index
    %9 = vector.load %arg5[%c0_6, %c0_7, %c0_8] : memref<1x8x96xbf16, #tpu.memory_space<vmem>>, vector<1x8x96xbf16>
    %10 = vector.shape_cast %9 : vector<1x8x96xbf16> to vector<8x96xbf16>
    %11 = vector.shape_cast %8 : vector<8x96xbf16> to vector<1x8x96xbf16>
    tpu.vector_store %arg5[%c0_6, %c0_7, %c0_8], %11 {strides = array<i32>} : memref<1x8x96xbf16, #tpu.memory_space<vmem>>, vector<1x8x96xbf16>,
    return
  }
  func.func @transform_0(%arg0: i32, %arg1: i32) -> (i32, i32, i32) {
    %c0_i32 = arith.constant 0 : i32
    %c0_i32_0 = arith.constant 0 : i32
    return %arg0, %arg1, %c0_i32 : i32, i32, i32
  }
  func.func @transform_1(%arg0: i32, %arg1: i32) -> (i32, i32) {
    %c0_i32 = arith.constant 0 : i32
    %c0_i32_0 = arith.constant 0 : i32
    %c0_i32_1 = arith.constant 0 : i32
    return %c0_i32, %c0_i32_0 : i32, i32
  }
  func.func @transform_2(%arg0: i32, %arg1: i32) -> (i32, i32) {
    %c0_i32 = arith.constant 0 : i32
    %c0_i32_0 = arith.constant 0 : i32
    %c0_i32_1 = arith.constant 0 : i32
    return %c0_i32, %c0_i32_0 : i32, i32
  }
  func.func @transform_3(%arg0: i32, %arg1: i32) -> (i32, i32, i32) {
    %c0_i32 = arith.constant 0 : i32
    %c0_i32_0 = arith.constant 0 : i32
    return %arg0, %arg1, %c0_i32 : i32, i32, i32
  }
}

</mosaic_0001>

<llo_original>
// kernel: tpu_custom_call.1
$region0: #{tpu_custom_call.1}
  #allocation0 [shape = 'u32[]', space=smem, size = 0x4, offset = 0x4, fixed_abs, tag = 'smem constant byte address 0x4 - core index']
  #allocation1 [shape = 'u32[144,128]{1,0:T(1,128)}', space=vmem, size = 0x12000, scoped, tag = 'internal scratch']
  %s0 = inlined_call_operand.hbm [shape: f32[2,8,32], index: 0, kind: input, shape index: {}]
  %s1 = inlined_call_operand.hbm [shape: bf16[32,96], index: 1, kind: input, shape index: {}]
  %s2 = inlined_call_operand.vmem [shape: f32[1,96], index: 2, kind: input, shape index: {}]
  %s3 = inlined_call_operand.hbm [shape: bf16[2,8,96], index: 3, kind: output, shape index: {}]
  %s4 = sld [smem:[#allocation0]]
  $region53: #{tpu_custom_call.1} parent=0
    _
  %s6 = ssub.s32 1, %s4
  %s7 = scalar_select 0, %s6, %s4
  $region1: #{tpu_custom_call.1} parent=0
    #allocation2 [shape = 'u8[8192]{0}', space=vmem, size = 0x2000, scoped, tag = 'input window, operand 0']
    #allocation3 [shape = 's32[2]{0}', space=sflag, size = 0x8, scoped, tag = 'scoped memory for tpu_custom_call.1']
    #allocation4 [shape = 's32[2]{0}', space=sflag, size = 0x8, scoped, tag = 'scoped memory for tpu_custom_call.1']
    #allocation5 [shape = 'u8[8192]{0}', space=vmem, size = 0x2000, scoped, tag = 'input window, operand 1, single buffered']
    #allocation6 [shape = 's32[1]{0}', space=sflag, size = 0x4, scoped, tag = 'scoped memory for tpu_custom_call.1']
    #allocation7 [shape = 'u8[4096]{0}', space=vmem, size = 0x1000, scoped, tag = 'output window, operand 0']
    %8 = vsyncpa [#allocation3], 0
    %s9 = scalar_lea.sflag [#allocation3], 1
    %10 = vsyncpa %s9, 0
    %11 = vsyncpa [#allocation6], 0
    %12 = vsyncpa [#allocation4], 0
    %s13 = scalar_lea.sflag [#allocation4], 1
    %14 = vsyncpa %s13, 0
    loop: start=0, step=1, limit=4
    $region2: #{tpu_custom_call.1} parent=1 // loop_pre_header
      _
    $region3: #{tpu_custom_call.1} parent=1 // loop_header
      %s16 = sphi 0, %s20
      %p17 = scmp.ge.s32.totalorder %s16, 4
      %s23 = sphi 0, %s35
      %s24 = sphi 0, %s31
      %s25 = sphi 0, %s23
      %s26 = sphi 0, %s24
      %s27 = sphi 0, %s25
      %s28 = sphi 0, %s26
      %s40 = sphi 0, %s42
      %s43 = sphi 0, %s40
      %s44 = sphi 0, %s43
      %s60 = sphi 0, %s44
      %s64 = sphi 0, %s64
      %s66 = sphi 0, %s64
      %s67 = sphi 0, %s66
      %s81 = sphi 0, %s67
      %s85 = sphi 0, %s85
      %s87 = sphi 0, %s85
      %s88 = sphi 0, %s87
      %s102 = sphi 0, %s88
      %s110 = sphi 0, %s112
      %s113 = sphi 0, %s110
      %s114 = sphi 0, %s113
      %s130 = sphi 0, %s114
    $region4: #{tpu_custom_call.1} parent=1 // loop_header_branch
      %19 = sbr.rel (%p17) target = $region8
    $region5: #{tpu_custom_call.1} parent=1 // loop_body
      %s21 = ssub.s32 %s16, 1
      %s22 = ssub.s32 %s16, 2
      %s29 = sadd.s32 1, %s24
      %p30 = scmp.ge.s32.totalorder %s29, 1
      %s31 = scalar_select %p30, 0, %s29
      %s32 = sadd.s32 1, %s23
      %s33 = scalar_select %p30, %s32, %s23
      %p34 = scmp.ge.s32.totalorder %s33, 2
      %s35 = scalar_select %p34, 0, %s33
      %s36 = ssub.s32 %s23, %s35
      %s37 = ssub.s32 %s24, %s31
      %s38 = sor.u32 %s36, %s37
      %p39 = scmp.eq.s32.totalorder %s38, 0
      %s41 = sadd.s32 %s40, 1
      %s42 = scalar_select %p39, %s40, %s41
      %p45 = pneg %p39
      %p46 = scmp.eq.s32.totalorder %s16, 1
      %p47 = por %p45, %p46
      %p48 = scmp.ne.s32.totalorder %s40, %s43
      %p49 = scmp.eq.s32.totalorder %s16, 0
      %p50 = por %p48, %p49
      %p51 = scmp.ne.s32.totalorder %s40, %s43
      %p52 = scmp.eq.s32.totalorder %s21, 1
      %p53 = por %p51, %p52
      %p54 = scmp.ne.s32.totalorder %s43, %s44
      %p55 = scmp.eq.s32.totalorder %s21, 0
      %p56 = por %p54, %p55
      %p57 = scmp.ne.s32.totalorder %s43, %s44
      %p58 = scmp.eq.s32.totalorder %s22, 1
      %p59 = por %p57, %p58
      %p61 = scmp.ne.s32.totalorder %s44, %s60
      %p62 = scmp.eq.s32.totalorder %s22, 0
      %p63 = por %p61, %p62
      %s65 = sadd.s32 %s64, 1
      %p68 = scmp.eq.s32.totalorder %s16, 1
      %p69 = scmp.ne.s32.totalorder %s64, %s66
      %p70 = scmp.eq.s32.totalorder %s16, 0
      %p71 = por %p69, %p70
      %p72 = scmp.ne.s32.totalorder %s64, %s66
      %p73 = scmp.eq.s32.totalorder %s21, 1
      %p74 = por %p72, %p73
      %p75 = scmp.ne.s32.totalorder %s66, %s67
      %p76 = scmp.eq.s32.totalorder %s21, 0
      %p77 = por %p75, %p76
      %p78 = scmp.ne.s32.totalorder %s66, %s67
      %p79 = scmp.eq.s32.totalorder %s22, 1
      %p80 = por %p78, %p79
      %p82 = scmp.ne.s32.totalorder %s67, %s81
      %p83 = scmp.eq.s32.totalorder %s22, 0
      %p84 = por %p82, %p83
      %s86 = sadd.s32 %s85, 1
      %p89 = scmp.eq.s32.totalorder %s16, 1
      %p90 = scmp.ne.s32.totalorder %s85, %s87
      %p91 = scmp.eq.s32.totalorder %s16, 0
      %p92 = por %p90, %p91
      %p93 = scmp.ne.s32.totalorder %s85, %s87
      %p94 = scmp.eq.s32.totalorder %s21, 1
      %p95 = por %p93, %p94
      %p96 = scmp.ne.s32.totalorder %s87, %s88
      %p97 = scmp.eq.s32.totalorder %s21, 0
      %p98 = por %p96, %p97
      %p99 = scmp.ne.s32.totalorder %s87, %s88
      %p100 = scmp.eq.s32.totalorder %s22, 1
      %p101 = por %p99, %p100
      %p103 = scmp.ne.s32.totalorder %s88, %s102
      %p104 = scmp.eq.s32.totalorder %s22, 0
      %p105 = por %p103, %p104
      %s106 = ssub.s32 %s23, %s35
      %s107 = ssub.s32 %s24, %s31
      %s108 = sor.u32 %s106, %s107
      %p109 = scmp.eq.s32.totalorder %s108, 0
      %s111 = sadd.s32 %s110, 1
      %s112 = scalar_select %p109, %s110, %s111
      %p115 = pneg %p109
      %p116 = scmp.eq.s32.totalorder %s16, 1
      %p117 = por %p115, %p116
      %p118 = scmp.ne.s32.totalorder %s110, %s113
      %p119 = scmp.eq.s32.totalorder %s16, 0
      %p120 = por %p118, %p119
      %p121 = scmp.ne.s32.totalorder %s110, %s113
      %p122 = scmp.eq.s32.totalorder %s21, 1
      %p123 = por %p121, %p122
      %p124 = scmp.ne.s32.totalorder %s113, %s114
      %p125 = scmp.eq.s32.totalorder %s21, 0
      %p126 = por %p124, %p125
      %p127 = scmp.ne.s32.totalorder %s113, %s114
      %p128 = scmp.eq.s32.totalorder %s22, 1
      %p129 = por %p127, %p128
      %p131 = scmp.ne.s32.totalorder %s114, %s130
      %p132 = scmp.eq.s32.totalorder %s22, 0
      %p133 = por %p131, %p132
      %p134 = scmp.le.s32.totalorder 1, %s16
      %p135 = scmp.lt.s32.totalorder %s16, 3
      %p136 = pnand %p134, %p135
      %p137 = pneg %p136
      // Predicated region
      $region9: #{tpu_custom_call.1} parent=5 // pred_check
        _
      $region10: #{tpu_custom_call.1} parent=5 // pred_check_branch
        %139 = sbr.rel (%p136) target = $region12
      $region11: #{tpu_custom_call.1} parent=5 // pred_region
        %s140 = ssub.s32 %s16, 1
        // Predicated region
        $region13: #{tpu_custom_call.1} parent=11 // pred_check
          %p141 = pneg %p77
        $region14: #{tpu_custom_call.1} parent=11 // pred_check_branch
          %143 = sbr.rel (%p141) target = $region16
        $region15: #{tpu_custom_call.1} parent=11 // pred_region
          %s145 = ssub.s32 256, 256
          %146 = vsyncadd [#allocation6], %s145
          %s147 = sshll.u32 [#allocation5], 4
          %s148 = int_to_ptr.vmem [resolvable:$true] %s147
          %153 = dma.hbm_to_vmem [thread:$0]  %s1, 256, %s148, [#allocation6], 64, 64, 4
        $region16: #{tpu_custom_call.1} parent=11 // pred_fallthru
          _
        // Predicated region
        $region17: #{tpu_custom_call.1} parent=11 // pred_check
          %p154 = pneg %p98
        $region18: #{tpu_custom_call.1} parent=11 // pred_check_branch
          %156 = sbr.rel (%p154) target = $region20
        $region19: #{tpu_custom_call.1} parent=11 // pred_region
          _
        $region20: #{tpu_custom_call.1} parent=11 // pred_fallthru
          _
      $region12: #{tpu_custom_call.1} parent=5 // pred_fallthru
        _
      %p157 = scmp.lt.s32.totalorder %s16, 2
      // Predicated region
      $region21: #{tpu_custom_call.1} parent=5 // pred_check
        %p158 = pneg %p157
      $region22: #{tpu_custom_call.1} parent=5 // pred_check_branch
        %160 = sbr.rel (%p158) target = $region24
      $region23: #{tpu_custom_call.1} parent=5 // pred_region
        // Predicated region
        $region25: #{tpu_custom_call.1} parent=23 // pred_check
          %p161 = pneg %p50
        $region26: #{tpu_custom_call.1} parent=23 // pred_check_branch
          %163 = sbr.rel (%p161) target = $region28
        $region27: #{tpu_custom_call.1} parent=23 // pred_region
          %s164 = sand.u32 %s40, 1
          %s165 = scalar_lea.sflag [#allocation3], %s164
          %s166 = sand.u32 %s40, 1
          %s167 = smul.addr %s166, 8
          %s168 = scalar_lea.vmem [#allocation2], %s167
          %s170 = ssub.s32 128, 128
          %171 = vsyncadd %s165, %s170
          %s172 = sadd.s32 %s24, %s23
          %s173 = smul.addr %s172, 128
          %s174 = scalar_lea.hbm %s0, %s173
          %s176 = sshll.u32 %s168, 4
          %s177 = int_to_ptr.vmem [resolvable:$true] %s176
          %179 = dma.hbm_to_vmem [thread:$0]  %s174, 128, %s177, %s165
        $region28: #{tpu_custom_call.1} parent=23 // pred_fallthru
          _
      $region24: #{tpu_custom_call.1} parent=5 // pred_fallthru
        _
      %p180 = scmp.le.s32.totalorder 1, %s16
      %p181 = scmp.lt.s32.totalorder %s16, 3
      %p182 = pnand %p180, %p181
      %p183 = pneg %p182
      // Predicated region
      $region29: #{tpu_custom_call.1} parent=5 // pred_check
        _
      $region30: #{tpu_custom_call.1} parent=5 // pred_check_branch
        %185 = sbr.rel (%p182) target = $region32
      $region31: #{tpu_custom_call.1} parent=5 // pred_region
        %s186 = ssub.s32 %s16, 1
        %s187 = sand.u32 %s43, 1
        %s188 = scalar_lea.sflag [#allocation3], %s187
        %s189 = sand.u32 %s43, 1
        %s190 = smul.addr %s189, 8
        %s191 = scalar_lea.vmem [#allocation2], %s190
        // Predicated region
        $region33: #{tpu_custom_call.1} parent=31 // pred_check
          %p192 = pneg %p56
        $region34: #{tpu_custom_call.1} parent=31 // pred_check_branch
          %194 = sbr.rel (%p192) target = $region36
        $region35: #{tpu_custom_call.1} parent=31 // pred_region
          %195 = dma.done %s188, 128
        $region36: #{tpu_custom_call.1} parent=31 // pred_fallthru
          _
        // Predicated region
        $region37: #{tpu_custom_call.1} parent=31 // pred_check
          %p196 = pneg %p77
        $region38: #{tpu_custom_call.1} parent=31 // pred_check_branch
          %198 = sbr.rel (%p196) target = $region40
        $region39: #{tpu_custom_call.1} parent=31 // pred_region
          %199 = dma.done [#allocation6], 256
        $region40: #{tpu_custom_call.1} parent=31 // pred_fallthru
          _
        %s200 = sand.u32 %s43, 1
        %s201 = scalar_lea.sflag [#allocation3], %s200
        %s202 = sand.u32 %s43, 1
        %s203 = smul.addr %s202, 8
        %s204 = scalar_lea.vmem [#allocation2], %s203
        %p205 = pneg %p56
        %p206 = pneg %p53
        %p207 = pneg %p77
        %p208 = pneg %p74
        %p209 = pneg %p98
        %p210 = pneg %p95
        %p211 = pneg %p126
        %p212 = pneg %p123
        %s213 = sand.u32 %s113, 1
        %s214 = scalar_lea.sflag [#allocation4], %s213
        %s215 = sand.u32 %s113, 1
        %s216 = smul.addr %s215, 4
        %s217 = scalar_lea.vmem [#allocation7], %s216
        %v219 = vld [vmem:[%s191] sm:$0xff]
        %v220 = vpack.c.bf16 %v219, %v219
        %v221 = vld [vmem:[#allocation5] sm:$0xf]
        %v222 = vld [vmem:[#allocation5 + $0x4] sm:$0xf]
        %v223 = vld [vmem:[#allocation5 + $0x8] sm:$0xf]
        %v224 = vld [vmem:[#allocation5 + $0xc] sm:$0xf]
        %v225 = vld [vmem:[%s2] sm:$0x1]
        %v227 = vlaneseq
        %v228 = vshrl.u32 %v227, 7
        %v229 = vsub.s32 0, %v228
        %v230 = vrot.slane %v225, %v229
        %v236 = vunpack.c.l.b16 %v221
        %v237 = vunpack.c.l.b16 %v222
        %v238 = vunpack.c.l.b16 %v223
        %v239 = vunpack.c.l.b16 %v224
        %v240 = vpack.c.b16 %v237, %v236
        %v241 = vpack.c.b16 %v239, %v238
        %vm244 = vcmask 261120
        %v246 = vsel %vm244, %v220, 0
        %248 = vmatprep.subr.bf16.mxu0 0
        %249 = vmatpush1.bf16.msra.mxu0 %v240
        %250 = vmatprep.subr.bf16.mxu0 0
        %251 = vmatpush1.bf16.msra.mxu0 %v241
        %252 = vmatprep.subr.bf16.mxu0 0
        %253 = vmatpush1.bf16.msra.mxu0 0
        %254 = vmatprep.subr.bf16.mxu0 0
        %255 = vmatpush1.bf16.msra.mxu0 0
        %256 = vmatprep.subr.bf16.mxu0 0
        %257 = vmatpush1.bf16.msra.mxu0 0
        %258 = vmatprep.subr.bf16.mxu0 0
        %259 = vmatpush1.bf16.msra.mxu0 0
        %260 = vmatprep.subr.bf16.mxu0 0
        %261 = vmatpush1.bf16.msra.mxu0 0
        %262 = vmatprep.subr.bf16.mxu0 0
        %263 = vmatpush1.bf16.msra.mxu0 0
        %264 = vmatprep.subr.bf16.mxu0 0
        %265 = vmatpush1.bf16.msra.mxu0 0
        %266 = vmatprep.subr.bf16.mxu0 0
        %267 = vmatpush1.bf16.msra.mxu0 0
        %268 = vmatprep.subr.bf16.mxu0 0
        %269 = vmatpush1.bf16.msra.mxu0 0
        %270 = vmatprep.subr.bf16.mxu0 0
        %271 = vmatpush1.bf16.msra.mxu0 0
        %272 = vmatprep.subr.bf16.mxu0 0
        %273 = vmatpush1.bf16.msra.mxu0 0
        %274 = vmatprep.subr.bf16.mxu0 0
        %275 = vmatpush1.bf16.msra.mxu0 0
        %276 = vmatprep.subr.bf16.mxu0 0
        %277 = vmatpush1.bf16.msra.mxu0 0
        %278 = vmatprep.subr.bf16.mxu0 0
        %279 = vmatpush1.bf16.msra.mxu0 0
        %280 = vmatprep.mubr.bf16.mxu0 0
        %281 = vmatmul.mubr.bf16.gmra.mrb[0].mxu0 %v246
        %v282 = vpop.f32.mrb[0].mxu0
        %v283 = vadd.f32 %v230, %v282
        %v284 = vpop.f32.mrb[0].mxu0
        %v285 = vpop.f32.mrb[0].mxu0
        %v286 = vpop.f32.mrb[0].mxu0
        %287 = vdwg.mxu0
        %v288 = vpack.c.bf16 %v283, %v283
        %vm289 = vcmask 781312
        %290 = vst.msk [vmem:[%s217] sm:$0xf] %vm289, %v288
        %s291 = sand.u32 %s113, 1
        %s292 = scalar_lea.sflag [#allocation4], %s291
        %s293 = sand.u32 %s113, 1
        %s294 = smul.addr %s293, 4
        %s295 = scalar_lea.vmem [#allocation7], %s294
        // Predicated region
        $region41: #{tpu_custom_call.1} parent=31 // pred_check
          %p296 = pneg %p123
        $region42: #{tpu_custom_call.1} parent=31 // pred_check_branch
          %298 = sbr.rel (%p296) target = $region44
        $region43: #{tpu_custom_call.1} parent=31 // pred_region
          %s300 = ssub.s32 64, 64
          %301 = vsyncadd %s292, %s300
          %s302 = sadd.s32 %s26, %s25
          %s303 = smul.addr %s302, 64
          %s304 = scalar_lea.hbm %s3, %s303
          %s306 = sshll.u32 %s295, 4
          %s307 = int_to_ptr.vmem [resolvable:$true] %s306
          %309 = dma.vmem_to_hbm [thread:$0]  %s307, 64, %s304, %s292
        $region44: #{tpu_custom_call.1} parent=31 // pred_fallthru
          _
      $region32: #{tpu_custom_call.1} parent=5 // pred_fallthru
        _
      %p310 = scmp.le.s32.totalorder 2, %s16
      // Predicated region
      $region45: #{tpu_custom_call.1} parent=5 // pred_check
        %p311 = pneg %p310
      $region46: #{tpu_custom_call.1} parent=5 // pred_check_branch
        %313 = sbr.rel (%p311) target = $region48
      $region47: #{tpu_custom_call.1} parent=5 // pred_region
        %s314 = ssub.s32 %s16, 2
        // Predicated region
        $region49: #{tpu_custom_call.1} parent=47 // pred_check
          %p315 = pneg %p129
        $region50: #{tpu_custom_call.1} parent=47 // pred_check_branch
          %317 = sbr.rel (%p315) target = $region52
        $region51: #{tpu_custom_call.1} parent=47 // pred_region
          %s318 = sand.u32 %s114, 1
          %s319 = scalar_lea.sflag [#allocation4], %s318
          %s320 = sand.u32 %s114, 1
          %s321 = smul.addr %s320, 4
          %s322 = scalar_lea.vmem [#allocation7], %s321
          %323 = dma.done %s319, 64
        $region52: #{tpu_custom_call.1} parent=47 // pred_fallthru
          _
      $region48: #{tpu_custom_call.1} parent=5 // pred_fallthru
        _
    $region6: #{tpu_custom_call.1} parent=1 // loop_footer
      %s20 = sadd.s32 1, %s16
    $region7: #{tpu_custom_call.1} parent=1 // loop_footer_branch
      %15 = sbr.rel target = $region3
    $region8: #{tpu_custom_call.1} parent=1 // loop_exit
      _
    %324 = vsyncpa [#allocation3], 1
    %s325 = scalar_lea.sflag [#allocation3], 1
    %326 = vsyncpa %s325, 1
    %327 = vsyncpa [#allocation6], 1
    %328 = vsyncpa [#allocation4], 1
    %s329 = scalar_lea.sflag [#allocation4], 1
    %330 = vsyncpa %s329, 1

</llo_original>
